<compile_context>
chip_gen: v5e
topology: v5e:2x2
jax: 0.10.0
libtpu: 0.0.40
codegen_flags: <defaults>
</compile_context>

<pallas_src>
import functools

import jax
import jax.numpy as jnp
import numpy as np
from jax import lax
from jax.experimental import pallas as pl
from jax.experimental.pallas import tpu as pltpu

_INT32_SENTINEL = int(np.iinfo(np.int32).max)


def _vmem_limit_bytes():
    """<= 3/4 of per-core VMEM (48 MiB on v7x, 96 MiB on v5e/v6e); safe fallback."""
    cap = 64 * 1024 * 1024
    try:
        info = pltpu.get_tpu_info()
        cap = int(getattr(info, "vmem_capacity_bytes", cap)) or cap
    except Exception:
        pass
    return int(min(cap * 3 // 4, 100 * 1024 * 1024))


def _pairwise_compiler_params(vmem_limit):
    return pltpu.CompilerParams(
        dimension_semantics=("parallel", "arbitrary"),
        vmem_limit_bytes=vmem_limit,
    )


def _fold(i, gi):
    """Bijective interleave of the parallel row-tile axis (pairs small and large row
    tiles) so a contiguous megacore split of the triangular `j <= i` workload in
    stage 2 is balanced across the two TensorCores of v7x."""
    return jnp.where(i % 2 == 0, i // 2, gi - 1 - i // 2)


# --------------------------------------------------------------------------------------
# 1) flattened voxel ids (tiled over N, lane-dense output)
# --------------------------------------------------------------------------------------
def _cluster_kernel(start_ref, strides_ref, pts_ref, ids_ref, *, gs, tile, n):
    """Flattened voxel id per point; padded lanes get an INT32_MAX sentinel."""
    i = pl.program_id(0)
    row = lax.broadcasted_iota(jnp.int32, (4, 1), 0)
    gsv = jnp.where(row == 0, jnp.float32(gs[0]),
          jnp.where(row == 1, jnp.float32(gs[1]),
          jnp.where(row == 2, jnp.float32(gs[2]), jnp.float32(gs[3]))))
    # NOTE: true division (not reciprocal multiply) keeps floor() bit-exact with the
    # torch_cluster reference at cell boundaries; this stage is O(N) and cheap.
    cell = jnp.floor((pts_ref[...] - start_ref[...]) / gsv).astype(jnp.int32)   # [4, T]
    # TODO(synk): flattened ids are int32; extremely fine grids over large extents can
    # overflow (the torch/numpy reference uses int64) and could collide with the
    # INT32_MAX padding sentinel.
    ids = jnp.sum(cell * strides_ref[...], axis=0, keepdims=True)               # [1, T]
    col = i * tile + lax.broadcasted_iota(jnp.int32, (1, tile), 1)
    ids_ref[...] = jnp.where(col < n, ids, _INT32_SENTINEL)


# --------------------------------------------------------------------------------------
# 2) first-occurrence mask
# --------------------------------------------------------------------------------------
def _is_first_kernel(cl_j_ref, cl_i_ref, isf_ref, *, tile, gi):
    """isf[i] = 1 iff no j < i has the same voxel id (first occurrence of its voxel)."""
    i = _fold(pl.program_id(0), gi)      # physical row (output) tile -> "parallel" axis
    j = pl.program_id(1)                 # reduction tile             -> "arbitrary" axis

    @pl.when(j == 0)
    def _init():
        isf_ref[...] = jnp.zeros_like(isf_ref)

    @pl.when(j < i)                      # strictly-lower tiles: every element has j < i
    def _off_diagonal():
        dup = cl_j_ref[...] == cl_i_ref[...]                  # [T,1] == [1,T] -> [T,T]
        isf_ref[...] += jnp.sum(dup.astype(jnp.int32), axis=0, keepdims=True)

    @pl.when(j == i)                     # diagonal tile needs the index comparison
    def _diagonal():
        jj = lax.broadcasted_iota(jnp.int32, (tile, 1), 0)
        ii = lax.broadcasted_iota(jnp.int32, (1, tile), 1)
        dup = (cl_j_ref[...] == cl_i_ref[...]) & (jj < ii)
        isf_ref[...] += jnp.sum(dup.astype(jnp.int32), axis=0, keepdims=True)

    @pl.when(j == pl.num_programs(1) - 1)
    def _finalize():
        isf_ref[...] = (isf_ref[...] == 0).astype(jnp.int32)


# --------------------------------------------------------------------------------------
# 3) inverse mapping (rank of voxel id among sorted distinct ids)
# --------------------------------------------------------------------------------------
def _inv_kernel(cl_j_ref, isf_j_ref, cl_i_ref, inv_ref):
    """inv[i] = #{distinct voxel ids strictly smaller than the voxel id of point i}."""
    j = pl.program_id(1)

    @pl.when(j == 0)
    def _init():
        inv_ref[...] = jnp.zeros_like(inv_ref)

    less = cl_j_ref[...] < cl_i_ref[...]                      # [T,1] < [1,T] -> [T,T]
    first = isf_j_ref[...] > 0                                # [T,1] first-occurrence
    inv_ref[...] += jnp.sum((less & first).astype(jnp.int32), axis=0, keepdims=True)


# --------------------------------------------------------------------------------------
# 4) scatter-mean into sorted voxel columns (transposed, lane-dense layout)
# --------------------------------------------------------------------------------------
def _scatter_mean_kernel(inv_ref, pts_ref, out_ref, *, tile):
    """out[:, m] = mean of points with inv == m.  Counts are fused into the matmul as
    an all-ones point row, so one MXU pass per tile pair produces sums | counts."""
    m = pl.program_id(0)                 # output voxel-column tile -> "parallel"
    i = pl.program_id(1)                 # point tile (reduction)   -> "arbitrary"

    @pl.when(i == 0)
    def _init():
        out_ref[...] = jnp.zeros_like(out_ref)

    m_glob = m * tile + lax.broadcasted_iota(jnp.int32, (1, tile), 1)       # [1, T_m]
    onehot_t = (inv_ref[...] == m_glob).astype(jnp.float32)                 # [T_i, T_m]
    out_ref[...] += jnp.dot(pts_ref[...], onehot_t,                         # [5, T_m]
                            preferred_element_type=jnp.float32)

    @pl.when(i == pl.num_programs(1) - 1)
    def _finalize():
        acc = out_ref[...]
        out_ref[...] = acc / jnp.maximum(acc[4:5, :], 1.0)  # empty / padded columns -> 0


# --------------------------------------------------------------------------------------
# wrapper
# --------------------------------------------------------------------------------------
def grid_sampling_3d(points, grid_size, *, tile=1024):
    """Pallas GridSampling3D forward (return_inverse=True semantics).

    Args:
      points:    [N, 4] float32, column 0 is the batch index.
      grid_size: float or list of 3 floats (treated as a compile-time constant).
      tile:      pairwise tile size (clamped to a multiple of 128); the O(N^2) work is
                 tiled so only O(tile^2) intermediates are ever live in VMEM.

    Returns:
      sampled_pad: [N, 4] f32 - valid rows are sampled_pad[:num_grids].
      inv:         [N]    i32 - point-to-voxel mapping (rank in sorted voxel-id order).
      num_grids:   [1, 1] i32 - number of occupied voxels (dynamic quantity).
    """
    if isinstance(grid_size, (list, tuple)):
        gs = (1.0,) + tuple(float(g) for g in grid_size)
    else:
        gs = (1.0, float(grid_size), float(grid_size), float(grid_size))
    assert len(gs) == 4, "Expecting 4D grid size."

    points = points.astype(jnp.float32)
    n = points.shape[0]
    vmem_limit = _vmem_limit_bytes()

    tile = max(128, (int(tile) // 128) * 128)
    tile = min(tile, pl.cdiv(n, 128) * 128)
    n_pad = pl.cdiv(n, tile) * tile
    pad = n_pad - n
    gi = n_pad // tile

    # --- tiny O(N) bounds + 4-element stride vector in plain XLA (feeds stage 1) -------
    gs_vec = jnp.asarray(gs, jnp.float32)
    adj = jnp.asarray([0.5, 0.0, 0.0, 0.0], jnp.float32)
    start = jnp.min(points, axis=0) - adj                                   # [4]
    end = jnp.max(points, axis=0) + adj                                     # [4]
    nvox = jnp.floor((end - start) / gs_vec).astype(jnp.int32) + 1          # [4]
    strides = jnp.concatenate(
        [jnp.ones((1,), jnp.int32), jnp.cumprod(nvox[:3]).astype(jnp.int32)]
    ).reshape(4, 1)                                                         # [1,k1,k2,k3]
    start_col = start.reshape(4, 1)

    # lane-dense transposed points; cluster input edge-padded (padded ids are replaced
    # by the sentinel in-kernel), scatter input zero-padded (+ ones row) so padded
    # points carry zero weight and zero count.
    pts_t = jnp.transpose(points)                                           # [4, N]
    pts_cluster = jnp.pad(pts_t, ((0, 0), (0, pad)), mode="edge")           # [4, N_pad]
    pts_aug_t = jnp.pad(
        jnp.concatenate([pts_t, jnp.ones((1, n), jnp.float32)], axis=0),
        ((0, 0), (0, pad)))                                                 # [5, N_pad]

    # --- 1) flattened voxel ids, lane-dense [1, N_pad] ----------------------------------
    cl = pl.pallas_call(
        functools.partial(_cluster_kernel, gs=gs, tile=tile, n=n),
        out_shape=jax.ShapeDtypeStruct((1, n_pad), jnp.int32),
        grid=(gi,),
        in_specs=[pl.BlockSpec((4, 1), lambda i: (0, 0)),
                  pl.BlockSpec((4, 1), lambda i: (0, 0)),
                  pl.BlockSpec((4, tile), lambda i: (0, i))],
        out_specs=pl.BlockSpec((1, tile), lambda i: (0, i)),
        compiler_params=pltpu.CompilerParams(
            dimension_semantics=("parallel",), vmem_limit_bytes=vmem_limit),
    )(start_col, strides, pts_cluster)

    # column-oriented view is a free row-major reshape of the lane-dense ids
    cl_col = cl.reshape(n_pad, 1)

    grid = (gi, gi)

    # --- 2) first-occurrence mask, lane-dense [1, N_pad] int32 ---------------------------
    isf = pl.pallas_call(
        functools.partial(_is_first_kernel, tile=tile, gi=gi),
        out_shape=jax.ShapeDtypeStruct((1, n_pad), jnp.int32),
        grid=grid,
        in_specs=[pl.BlockSpec((tile, 1), lambda i, j: (j, 0)),
                  pl.BlockSpec((1, tile), lambda i, j: (0, _fold(i, gi)))],
        out_specs=pl.BlockSpec((1, tile), lambda i, j: (0, _fold(i, gi))),
        compiler_params=_pairwise_compiler_params(vmem_limit),
    )(cl_col, cl)

    isf_col = isf.reshape(n_pad, 1)

    # --- 3) inv = rank of voxel id among sorted distinct ids, int32 ----------------------
    inv = pl.pallas_call(
        _inv_kernel,
        out_shape=jax.ShapeDtypeStruct((1, n_pad), jnp.int32),
        grid=grid,
        in_specs=[pl.BlockSpec((tile, 1), lambda i, j: (j, 0)),
                  pl.BlockSpec((tile, 1), lambda i, j: (j, 0)),
                  pl.BlockSpec((1, tile), lambda i, j: (0, i))],
        out_specs=pl.BlockSpec((1, tile), lambda i, j: (0, i)),
        compiler_params=_pairwise_compiler_params(vmem_limit),
    )(cl_col, isf_col, cl)

    inv_col = inv.reshape(n_pad, 1)

    # --- 4) scatter-mean into sorted voxel columns, lane-dense [5, N_pad] output ---------
    out_t = pl.pallas_call(
        functools.partial(_scatter_mean_kernel, tile=tile),
        out_shape=jax.ShapeDtypeStruct((5, n_pad), jnp.float32),
        grid=grid,
        in_specs=[pl.BlockSpec((tile, 1), lambda m, i: (i, 0)),
                  pl.BlockSpec((5, tile), lambda m, i: (0, i))],
        out_specs=pl.BlockSpec((5, tile), lambda m, i: (0, m)),
        compiler_params=_pairwise_compiler_params(vmem_limit),
    )(inv_col, pts_aug_t)

    num_grids = jnp.sum(isf[0, :n]).reshape(1, 1)                           # int32, exact
    # TODO(synk): point sums accumulate in f32 (the reference uses f64); voxels with very
    # many points can drift slightly relative to a float64 mean.
    sampled_pad = jnp.transpose(out_t[:4, :n])                              # [N, 4]
    return sampled_pad, inv[0, :n], num_grids


# --------------------------------------------------------------------------------------
# reference + test
# --------------------------------------------------------------------------------------
def _reference_numpy(points_np, grid_size):
    """Pure-numpy reference mirroring torch_cluster.grid_cluster + scatter mean."""
    p = np.asarray(points_np, dtype=np.float32)
    gs = np.array([1.0, grid_size, grid_size, grid_size], dtype=np.float32)
    start = p.min(0).copy()
    start[0] -= 0.5
    end = p.max(0).copy()
    end[0] += 0.5
    cell = np.floor((p - start) / gs).astype(np.int64)
    nvox = np.floor((end - start) / gs).astype(np.int64) + 1
    strides = np.array([1, nvox[0], nvox[0] * nvox[1], nvox[0] * nvox[1] * nvox[2]],
                       dtype=np.int64)
    cluster = (cell * strides).sum(1)
    uniq, inv = np.unique(cluster, return_inverse=True)
    m = uniq.shape[0]
    sums = np.zeros((m, 4), np.float64)
    np.add.at(sums, inv, p)
    counts = np.zeros(m, np.float64)
    np.add.at(counts, inv, 1.0)
    return (sums / counts[:, None]).astype(np.float32), inv.astype(np.int64), m


if __name__ == "__main__":
    key = jax.random.PRNGKey(0)
    kb, kx = jax.random.split(key)
    N = 500
    batch_idx = jax.random.randint(kb, (N, 1), 0, 2).astype(jnp.float32)
    xyz = jax.random.uniform(kx, (N, 3), minval=0.0, maxval=8.0, dtype=jnp.float32)
    points = jnp.concatenate([batch_idx, xyz], axis=1)          # [N, 4]

    grid_size = 2.0
    # tile=128 -> N padded to 512 and a 4x4 pairwise grid (exercises tiling, padding and
    # the folded/balanced parallel row-tile axis).
    sampled_pad, inv, ng = grid_sampling_3d(points, grid_size, tile=128)
    jax.block_until_ready((sampled_pad, inv, ng))

    num_grids = int(np.asarray(ng)[0, 0])
    sampled = np.asarray(sampled_pad)[:num_grids]

    ref_sampled, ref_inv, ref_m = _reference_numpy(np.asarray(points), grid_size)

    assert num_grids == ref_m, (num_grids, ref_m)
    assert np.array_equal(np.asarray(inv), ref_inv)
    assert np.allclose(sampled, ref_sampled, rtol=1e-5, atol=1e-5)
    print("KERNEL_OK")
</pallas_src>

<mosaic_0001>
module attributes {stable_mosaic.version = 11 : i64} {
  func.func @_cluster_kernel(%arg0: i32, %arg1: memref<4x1xf32, #tpu.memory_space<vmem>>, %arg2: memref<4x1xi32, #tpu.memory_space<vmem>>, %arg3: memref<4x128xf32, #tpu.memory_space<vmem>>, %arg4: memref<1x128xi32, #tpu.memory_space<vmem>>) attributes {dimension_semantics = [#tpu.dimension_semantics<parallel>], iteration_bounds = array<i64: 4>, scalar_prefetch = 0 : i64, scratch_operands = 0 : i64, tpu.core_type = #tpu.core_type<tc>, window_params = [{pipeline_mode = #tpu.pipeline_mode<synchronous>, transform_indices = @transform_0, window_bounds = array<i64: 4, 1>}, {pipeline_mode = #tpu.pipeline_mode<synchronous>, transform_indices = @transform_1, window_bounds = array<i64: 4, 1>}, {transform_indices = @transform_2, window_bounds = array<i64: 4, 128>}, {transform_indices = @transform_3, window_bounds = array<i64: 1, 128>}]} {
    %0 = tpu.iota {dimensions = array<i32: 0>} : vector<4x1xi32>
    %c0_i32 = arith.constant 0 : i32
    %1 = vector.broadcast %c0_i32 : i32 to vector<4x1xi32>
    %2 = arith.cmpi eq, %0, %1 : vector<4x1xi32>
    %c1_i32 = arith.constant 1 : i32
    %3 = vector.broadcast %c1_i32 : i32 to vector<4x1xi32>
    %4 = arith.cmpi eq, %0, %3 : vector<4x1xi32>
    %c2_i32 = arith.constant 2 : i32
    %5 = vector.broadcast %c2_i32 : i32 to vector<4x1xi32>
    %6 = arith.cmpi eq, %0, %5 : vector<4x1xi32>
    %cst = arith.constant 2.000000e+00 : f32
    %cst_0 = arith.constant 2.000000e+00 : f32
    %7 = vector.broadcast %cst : f32 to vector<4x1xf32>
    %8 = vector.broadcast %cst_0 : f32 to vector<4x1xf32>
    %9 = arith.select %6, %7, %8 : vector<4x1xi1>, vector<4x1xf32>
    %cst_1 = arith.constant 2.000000e+00 : f32
    %10 = vector.broadcast %cst_1 : f32 to vector<4x1xf32>
    %11 = arith.select %4, %10, %9 : vector<4x1xi1>, vector<4x1xf32>
    %cst_2 = arith.constant 1.000000e+00 : f32
    %12 = vector.broadcast %cst_2 : f32 to vector<4x1xf32>
    %13 = arith.select %2, %12, %11 : vector<4x1xi1>, vector<4x1xf32>
    %c0 = arith.constant 0 : index
    %c0_3 = arith.constant 0 : index
    %14 = vector.load %arg3[%c0, %c0_3] : memref<4x128xf32, #tpu.memory_space<vmem>>, vector<4x128xf32>
    %c0_4 = arith.constant 0 : index
    %c0_5 = arith.constant 0 : index
    %15 = vector.load %arg1[%c0_4, %c0_5] : memref<4x1xf32, #tpu.memory_space<vmem>>, vector<4x1xf32>
    %16 = vector.broadcast %15 : vector<4x1xf32> to vector<4x128xf32>
    %17 = arith.subf %14, %16 : vector<4x128xf32>
    %18 = vector.broadcast %13 : vector<4x1xf32> to vector<4x128xf32>
    %19 = arith.divf %17, %18 : vector<4x128xf32>
    %20 = math.floor %19 : vector<4x128xf32>
    %21 = arith.fptosi %20 : vector<4x128xf32> to vector<4x128xi32>
    %c0_6 = arith.constant 0 : index
    %c0_7 = arith.constant 0 : index
    %22 = vector.load %arg2[%c0_6, %c0_7] : memref<4x1xi32, #tpu.memory_space<vmem>>, vector<4x1xi32>
    %23 = vector.broadcast %22 : vector<4x1xi32> to vector<4x128xi32>
    %24 = arith.muli %21, %23 : vector<4x128xi32>
    %cst_8 = arith.constant dense<0> : vector<128xi32>
    %25 = vector.multi_reduction <add>, %24, %cst_8 [0] : vector<4x128xi32> to vector<128xi32>
    %26 = vector.shape_cast %25 : vector<128xi32> to vector<1x128xi32>
    %c128_i32 = arith.constant 128 : i32
    %27 = arith.muli %arg0, %c128_i32 : i32
    %28 = tpu.iota {dimensions = array<i32: 1>} : vector<1x128xi32>
    %29 = vector.broadcast %27 : i32 to vector<1x128xi32>
    %30 = arith.addi %29, %28 : vector<1x128xi32>
    %c500_i32 = arith.constant 500 : i32
    %31 = vector.broadcast %c500_i32 : i32 to vector<1x128xi32>
    %32 = arith.cmpi slt, %30, %31 : vector<1x128xi32>
    %c2147483647_i32 = arith.constant 2147483647 : i32
    %33 = vector.broadcast %c2147483647_i32 : i32 to vector<1x128xi32>
    %34 = arith.select %32, %26, %33 : vector<1x128xi1>, vector<1x128xi32>
    %c0_9 = arith.constant 0 : index
    %c0_10 = arith.constant 0 : index
    %35 = vector.load %arg4[%c0_9, %c0_10] : memref<1x128xi32, #tpu.memory_space<vmem>>, vector<1x128xi32>
    tpu.vector_store %arg4[%c0_9, %c0_10], %34 {strides = array<i32>} : memref<1x128xi32, #tpu.memory_space<vmem>>, vector<1x128xi32>,
    return
  }
  func.func @transform_0(%arg0: i32) -> (i32, i32) {
    %c0_i32 = arith.constant 0 : i32
    %c0_i32_0 = arith.constant 0 : i32
    %c0_i32_1 = arith.constant 0 : i32
    return %c0_i32, %c0_i32_0 : i32, i32
  }
  func.func @transform_1(%arg0: i32) -> (i32, i32) {
    %c0_i32 = arith.constant 0 : i32
    %c0_i32_0 = arith.constant 0 : i32
    %c0_i32_1 = arith.constant 0 : i32
    return %c0_i32, %c0_i32_0 : i32, i32
  }
  func.func @transform_2(%arg0: i32) -> (i32, i32) {
    %c0_i32 = arith.constant 0 : i32
    %c0_i32_0 = arith.constant 0 : i32
    return %c0_i32, %arg0 : i32, i32
  }
  func.func @transform_3(%arg0: i32) -> (i32, i32) {
    %c0_i32 = arith.constant 0 : i32
    %c0_i32_0 = arith.constant 0 : i32
    return %c0_i32, %arg0 : i32, i32
  }
}

</mosaic_0001>

<llo_original>
// kernel: tpu_custom_call.1
$region0: #{tpu_custom_call.1}
  #allocation0 [shape = 'u32[]', space=smem, size = 0x4, offset = 0x4, fixed_abs, tag = 'smem constant byte address 0x4 - core index']
  #allocation1 [shape = 'u32[72,128]{1,0:T(1,128)}', space=vmem, size = 0x9000, scoped, tag = 'internal scratch']
  %s0 = inlined_call_operand.vmem [shape: f32[4,1], index: 0, kind: input, shape index: {}]
  %s1 = inlined_call_operand.vmem [shape: s32[4,1], index: 1, kind: input, shape index: {}]
  %s2 = inlined_call_operand.hbm [shape: f32[4,512], index: 2, kind: input, shape index: {}]
  %s3 = inlined_call_operand.hbm [shape: s32[1,512], index: 3, kind: output, shape index: {}]
  %s4 = sld [smem:[#allocation0]]
  $region49: #{tpu_custom_call.1} parent=0
    _
  %s6 = ssub.s32 1, %s4
  %s7 = scalar_select 0, %s6, %s4
  $region1: #{tpu_custom_call.1} parent=0
    #allocation2 [shape = 'u8[4096]{0}', space=vmem, size = 0x1000, scoped, tag = 'input window, operand 2']
    #allocation3 [shape = 's32[2]{0}', space=sflag, size = 0x8, scoped, tag = 'scoped memory for tpu_custom_call.1']
    #allocation4 [shape = 's32[2]{0}', space=sflag, size = 0x8, scoped, tag = 'scoped memory for tpu_custom_call.1']
    #allocation5 [shape = 'u8[1024]{0}', space=vmem, size = 0x400, scoped, tag = 'output window, operand 0']
    %8 = vsyncpa [#allocation3], 0
    %s9 = scalar_lea.sflag [#allocation3], 1
    %10 = vsyncpa %s9, 0
    %11 = vsyncpa [#allocation4], 0
    %s12 = scalar_lea.sflag [#allocation4], 1
    %13 = vsyncpa %s12, 0
    loop: start=0, step=1, limit=6
    $region2: #{tpu_custom_call.1} parent=1 // loop_pre_header
      _
    $region3: #{tpu_custom_call.1} parent=1 // loop_header
      %s15 = sphi 0, %s19
      %p16 = scmp.ge.s32.totalorder %s15, 6
      %s23 = sphi 0, %s23
      %s25 = sphi 0, %s23
      %s26 = sphi 0, %s25
      %s40 = sphi 0, %s26
      %s44 = sphi 0, %s44
      %s46 = sphi 0, %s44
      %s47 = sphi 0, %s46
      %s61 = sphi 0, %s47
      %s67 = sphi 0, %s69
      %s70 = sphi 0, %s67
      %s71 = sphi 0, %s70
      %s87 = sphi 0, %s71
      %s93 = sphi 0, %s95
      %s96 = sphi 0, %s93
      %s97 = sphi 0, %s96
      %s113 = sphi 0, %s97
    $region4: #{tpu_custom_call.1} parent=1 // loop_header_branch
      %18 = sbr.rel (%p16) target = $region8
    $region5: #{tpu_custom_call.1} parent=1 // loop_body
      %s20 = ssub.s32 %s15, 1
      %s21 = ssub.s32 %s15, 2
      %s22 = sadd.s32 %s15, 1
      %s24 = sadd.s32 %s23, 1
      %p27 = scmp.eq.s32.totalorder %s15, 3
      %p28 = scmp.ne.s32.totalorder %s23, %s25
      %p29 = scmp.eq.s32.totalorder %s15, 0
      %p30 = por %p28, %p29
      %p31 = scmp.ne.s32.totalorder %s23, %s25
      %p32 = scmp.eq.s32.totalorder %s20, 3
      %p33 = por %p31, %p32
      %p34 = scmp.ne.s32.totalorder %s25, %s26
      %p35 = scmp.eq.s32.totalorder %s20, 0
      %p36 = por %p34, %p35
      %p37 = scmp.ne.s32.totalorder %s25, %s26
      %p38 = scmp.eq.s32.totalorder %s21, 3
      %p39 = por %p37, %p38
      %p41 = scmp.ne.s32.totalorder %s26, %s40
      %p42 = scmp.eq.s32.totalorder %s21, 0
      %p43 = por %p41, %p42
      %s45 = sadd.s32 %s44, 1
      %p48 = scmp.eq.s32.totalorder %s15, 3
      %p49 = scmp.ne.s32.totalorder %s44, %s46
      %p50 = scmp.eq.s32.totalorder %s15, 0
      %p51 = por %p49, %p50
      %p52 = scmp.ne.s32.totalorder %s44, %s46
      %p53 = scmp.eq.s32.totalorder %s20, 3
      %p54 = por %p52, %p53
      %p55 = scmp.ne.s32.totalorder %s46, %s47
      %p56 = scmp.eq.s32.totalorder %s20, 0
      %p57 = por %p55, %p56
      %p58 = scmp.ne.s32.totalorder %s46, %s47
      %p59 = scmp.eq.s32.totalorder %s21, 3
      %p60 = por %p58, %p59
      %p62 = scmp.ne.s32.totalorder %s47, %s61
      %p63 = scmp.eq.s32.totalorder %s21, 0
      %p64 = por %p62, %p63
      %s65 = ssub.s32 %s15, %s22
      %p66 = scmp.eq.s32.totalorder %s65, 0
      %s68 = sadd.s32 %s67, 1
      %s69 = scalar_select %p66, %s67, %s68
      %p72 = pneg %p66
      %p73 = scmp.eq.s32.totalorder %s15, 3
      %p74 = por %p72, %p73
      %p75 = scmp.ne.s32.totalorder %s67, %s70
      %p76 = scmp.eq.s32.totalorder %s15, 0
      %p77 = por %p75, %p76
      %p78 = scmp.ne.s32.totalorder %s67, %s70
      %p79 = scmp.eq.s32.totalorder %s20, 3
      %p80 = por %p78, %p79
      %p81 = scmp.ne.s32.totalorder %s70, %s71
      %p82 = scmp.eq.s32.totalorder %s20, 0
      %p83 = por %p81, %p82
      %p84 = scmp.ne.s32.totalorder %s70, %s71
      %p85 = scmp.eq.s32.totalorder %s21, 3
      %p86 = por %p84, %p85
      %p88 = scmp.ne.s32.totalorder %s71, %s87
      %p89 = scmp.eq.s32.totalorder %s21, 0
      %p90 = por %p88, %p89
      %s91 = ssub.s32 %s15, %s22
      %p92 = scmp.eq.s32.totalorder %s91, 0
      %s94 = sadd.s32 %s93, 1
      %s95 = scalar_select %p92, %s93, %s94
      %p98 = pneg %p92
      %p99 = scmp.eq.s32.totalorder %s15, 3
      %p100 = por %p98, %p99
      %p101 = scmp.ne.s32.totalorder %s93, %s96
      %p102 = scmp.eq.s32.totalorder %s15, 0
      %p103 = por %p101, %p102
      %p104 = scmp.ne.s32.totalorder %s93, %s96
      %p105 = scmp.eq.s32.totalorder %s20, 3
      %p106 = por %p104, %p105
      %p107 = scmp.ne.s32.totalorder %s96, %s97
      %p108 = scmp.eq.s32.totalorder %s20, 0
      %p109 = por %p107, %p108
      %p110 = scmp.ne.s32.totalorder %s96, %s97
      %p111 = scmp.eq.s32.totalorder %s21, 3
      %p112 = por %p110, %p111
      %p114 = scmp.ne.s32.totalorder %s97, %s113
      %p115 = scmp.eq.s32.totalorder %s21, 0
      %p116 = por %p114, %p115
      %p117 = scmp.le.s32.totalorder 1, %s15
      %p118 = scmp.lt.s32.totalorder %s15, 5
      %p119 = pnand %p117, %p118
      %p120 = pneg %p119
      // Predicated region
      $region9: #{tpu_custom_call.1} parent=5 // pred_check
        _
      $region10: #{tpu_custom_call.1} parent=5 // pred_check_branch
        %122 = sbr.rel (%p119) target = $region12
      $region11: #{tpu_custom_call.1} parent=5 // pred_region
        %s123 = ssub.s32 %s15, 1
        // Predicated region
        $region13: #{tpu_custom_call.1} parent=11 // pred_check
          %p124 = pneg %p36
        $region14: #{tpu_custom_call.1} parent=11 // pred_check_branch
          %126 = sbr.rel (%p124) target = $region16
        $region15: #{tpu_custom_call.1} parent=11 // pred_region
          _
        $region16: #{tpu_custom_call.1} parent=11 // pred_fallthru
          _
        // Predicated region
        $region17: #{tpu_custom_call.1} parent=11 // pred_check
          %p127 = pneg %p57
        $region18: #{tpu_custom_call.1} parent=11 // pred_check_branch
          %129 = sbr.rel (%p127) target = $region20
        $region19: #{tpu_custom_call.1} parent=11 // pred_region
          _
        $region20: #{tpu_custom_call.1} parent=11 // pred_fallthru
          _
      $region12: #{tpu_custom_call.1} parent=5 // pred_fallthru
        _
      %p130 = scmp.lt.s32.totalorder %s15, 4
      // Predicated region
      $region21: #{tpu_custom_call.1} parent=5 // pred_check
        %p131 = pneg %p130
      $region22: #{tpu_custom_call.1} parent=5 // pred_check_branch
        %133 = sbr.rel (%p131) target = $region24
      $region23: #{tpu_custom_call.1} parent=5 // pred_region
        // Predicated region
        $region25: #{tpu_custom_call.1} parent=23 // pred_check
          %p134 = pneg %p77
        $region26: #{tpu_custom_call.1} parent=23 // pred_check_branch
          %136 = sbr.rel (%p134) target = $region28
        $region27: #{tpu_custom_call.1} parent=23 // pred_region
          %s137 = sand.u32 %s67, 1
          %s138 = scalar_lea.sflag [#allocation3], %s137
          %s139 = sand.u32 %s67, 1
          %s140 = smul.addr %s139, 4
          %s141 = scalar_lea.vmem [#allocation2], %s140
          %143 = vsyncadd %s138, 0
          %s144 = smul.addr %s15, 4
          %s145 = scalar_lea.hbm %s2, %s144
          %s147 = sshll.u32 %s145, 4
          %s148 = int_to_ptr.hbm [resolvable:$true] %s147
          %s149 = sshll.u32 %s141, 4
          %s150 = int_to_ptr.vmem [resolvable:$true] %s149
          %152 = dma.hbm_to_vmem [thread:$0]  %s148, 64, %s150, %s138
        $region28: #{tpu_custom_call.1} parent=23 // pred_fallthru
          _
      $region24: #{tpu_custom_call.1} parent=5 // pred_fallthru
        _
      %p153 = scmp.le.s32.totalorder 1, %s15
      %p154 = scmp.lt.s32.totalorder %s15, 5
      %p155 = pnand %p153, %p154
      %p156 = pneg %p155
      // Predicated region
      $region29: #{tpu_custom_call.1} parent=5 // pred_check
        _
      $region30: #{tpu_custom_call.1} parent=5 // pred_check_branch
        %158 = sbr.rel (%p155) target = $region32
      $region31: #{tpu_custom_call.1} parent=5 // pred_region
        %s159 = ssub.s32 %s15, 1
        %s160 = sand.u32 %s70, 1
        %s161 = scalar_lea.sflag [#allocation3], %s160
        %s162 = sand.u32 %s70, 1
        %s163 = smul.addr %s162, 4
        %s164 = scalar_lea.vmem [#allocation2], %s163
        // Predicated region
        $region33: #{tpu_custom_call.1} parent=31 // pred_check
          %p165 = pneg %p83
        $region34: #{tpu_custom_call.1} parent=31 // pred_check_branch
          %167 = sbr.rel (%p165) target = $region36
        $region35: #{tpu_custom_call.1} parent=31 // pred_region
          %169 = dma.done %s161, 64
        $region36: #{tpu_custom_call.1} parent=31 // pred_fallthru
          _
        %p170 = pneg %p36
        %p171 = pneg %p33
        %p172 = pneg %p57
        %p173 = pneg %p54
        %s174 = sand.u32 %s70, 1
        %s175 = scalar_lea.sflag [#allocation3], %s174
        %s176 = sand.u32 %s70, 1
        %s177 = smul.addr %s176, 4
        %s178 = scalar_lea.vmem [#allocation2], %s177
        %p179 = pneg %p83
        %p180 = pneg %p80
        %p181 = pneg %p109
        %p182 = pneg %p106
        %s183 = sand.u32 %s96, 1
        %s184 = scalar_lea.sflag [#allocation4], %s183
        %s185 = sand.u32 %s96, 1
        %s186 = scalar_lea.vmem [#allocation5], %s185
        %v187 = vlaneseq
        %v188 = vshrl.u32 %v187, 7
        %vm189 = vcmp.eq.s32.totalorder %v188, 0
        %v190 = vsel %vm189, 1.0, 2.0
        %v191 = vld [vmem:[%s164] sm:$0xf]
        %v192 = vld [vmem:[%s0] sm:$0xf]
        %194 = vset.pattern.permute.xlu0 0
        %195 = vperm.xlu0 %194, %v192
        %v196 = vpop.permute.xlu0 %195
        %v198 = vsub.f32 %v191, %v196
        %v199 = vrcp.pop %v190
        %v200 = vmul.f32 %v190, %v199
        %v201 = vsub.f32 1.0, %v200
        %v202 = vmul.f32 %v199, %v201
        %v203 = vadd.f32 %v199, %v202
        %vm204 = vweird.f32 %v190
        %vm205 = vweird.f32 %v199
        %vm206 = vmor %vm204, %vm205
        %v207 = vsel %vm206, %v199, %v203
        %v208 = vand.u32 2147483647, %v190
        %vm209 = vcmp.eq.f32.partialorder %v208, 8.507059e+37
        %v210 = vand.u32 %v190, 2147483648
        %v211 = vor.u32 1.1754944e-38, %v210
        %v212 = vsel %vm209, %v211, %v207
        %v213 = vmul.f32 %v198, %v212
        %v214 = vfloor.f32 %v213
        %v215 = vcvt.f32.s32.to.zero.pseudo %v214
        %v216 = vld [vmem:[%s1] sm:$0xf]
        %217 = vset.pattern.permute.xlu0 0
        %218 = vperm.xlu0 %217, %v216
        %v219 = vpop.permute.xlu0 %218
        %v220 = vmul.u32 %v215, %v219
        %vm221 = vcmask 1043456
        %v222 = vsel %vm221, %v220, 0
        %v223 = vrot.slane %v222, 4
        %v224 = vadd.s32 %v222, %v223
        %v225 = vrot.slane %v224, 2
        %v226 = vadd.s32 %v224, %v225
        %v227 = vrot.slane %v226, 1
        %v228 = vadd.s32 %v226, %v227
        %s229 = smul.u32 %s20, 128
        %v230 = vlaneseq
        %v231 = vand.u32 %v230, 127
        %v232 = vstv %s229
        %v233 = vadd.s32 %v232, %v231
        %vm234 = vcmp.lt.s32.totalorder %v233, 500
        %v235 = vsel %vm234, %v228, 2147483647
        %236 = vst [vmem:[%s186] sm:$0x1] %v235
        %s237 = sand.u32 %s96, 1
        %s238 = scalar_lea.sflag [#allocation4], %s237
        %s239 = sand.u32 %s96, 1
        %s240 = scalar_lea.vmem [#allocation5], %s239
        // Predicated region
        $region37: #{tpu_custom_call.1} parent=31 // pred_check
          %p241 = pneg %p106
        $region38: #{tpu_custom_call.1} parent=31 // pred_check_branch
          %243 = sbr.rel (%p241) target = $region40
        $region39: #{tpu_custom_call.1} parent=31 // pred_region
          %245 = vsyncadd %s238, 0
          %s246 = scalar_lea.hbm %s3, %s20
          %s248 = sshll.u32 %s240, 4
          %s249 = int_to_ptr.vmem [resolvable:$true] %s248
          %s250 = sshll.u32 %s246, 4
          %s251 = int_to_ptr.hbm [resolvable:$true] %s250
          %253 = dma.vmem_to_hbm [thread:$0]  %s249, 16, %s251, %s238
        $region40: #{tpu_custom_call.1} parent=31 // pred_fallthru
          _
      $region32: #{tpu_custom_call.1} parent=5 // pred_fallthru
        _
      %p254 = scmp.le.s32.totalorder 2, %s15
      // Predicated region
      $region41: #{tpu_custom_call.1} parent=5 // pred_check
        %p255 = pneg %p254
      $region42: #{tpu_custom_call.1} parent=5 // pred_check_branch
        %257 = sbr.rel (%p255) target = $region44
      $region43: #{tpu_custom_call.1} parent=5 // pred_region
        %s258 = ssub.s32 %s15, 2
        // Predicated region
        $region45: #{tpu_custom_call.1} parent=43 // pred_check
          %p259 = pneg %p112
        $region46: #{tpu_custom_call.1} parent=43 // pred_check_branch
          %261 = sbr.rel (%p259) target = $region48
        $region47: #{tpu_custom_call.1} parent=43 // pred_region
          %s262 = sand.u32 %s97, 1
          %s263 = scalar_lea.sflag [#allocation4], %s262
          %s264 = sand.u32 %s97, 1
          %s265 = scalar_lea.vmem [#allocation5], %s264
          %267 = dma.done %s263, 16
        $region48: #{tpu_custom_call.1} parent=43 // pred_fallthru
          _
      $region44: #{tpu_custom_call.1} parent=5 // pred_fallthru
        _
    $region6: #{tpu_custom_call.1} parent=1 // loop_footer
      %s19 = sadd.s32 1, %s15
    $region7: #{tpu_custom_call.1} parent=1 // loop_footer_branch
      %14 = sbr.rel target = $region3
    $region8: #{tpu_custom_call.1} parent=1 // loop_exit
      _
    %268 = vsyncpa [#allocation3], 1
    %s269 = scalar_lea.sflag [#allocation3], 1
    %270 = vsyncpa %s269, 1
    %271 = vsyncpa [#allocation4], 1
    %s272 = scalar_lea.sflag [#allocation4], 1
    %273 = vsyncpa %s272, 1

</llo_original>
